<compile_context>
chip_gen: v7x
topology: tpu7x:2x2x1
jax: 0.10.0
libtpu: 0.0.40
codegen_flags: <defaults>
</compile_context>

<pallas_src>
import functools

import jax
import jax.numpy as jnp
from jax import lax
from jax.experimental import pallas as pl
from jax.experimental.pallas import tpu as pltpu


def _round_up(x, m):
    return (x + m - 1) // m * m


def _unit_kernel(x_ref, dww_ref, pwa_ref, bias_ref, o_ref, acc_ref, *,
                 B_blk, Cin, Cout, L, Wp):
    """One grid step == B_blk images, (batch*channel) packed on sublanes.

    x_ref   : (B_blk*Cin, Lx)  zero-padded images, lanes = flattened p = h*Wp + w
    dww_ref : (B_blk*Cin, 9)   depthwise 3x3 weights tiled per image, tap = ky*3 + kx
    pwa_ref : (Cout, Cin)      pointwise 1x1 weights with BN scale folded in
    bias_ref: (Cout, 1)        fully folded per-channel bias
    o_ref   : (B_blk*Cout, L)  lane-dense output (L multiple of 128 -> unmasked stores)
    acc_ref : (B_blk*Cin, L)   VMEM scratch holding the depthwise result
    """
    # ---- depthwise 3x3: each tap is a static lane-offset slice of length L ----
    acc = x_ref[:, 0:L] * dww_ref[:, 0:1]                       # tap (0,0) initializes acc
    for ky in range(3):
        for kx in range(3):
            tap = ky * 3 + kx
            if tap == 0:
                continue
            off = ky * Wp + kx
            acc = acc + x_ref[:, off:off + L] * dww_ref[:, tap:tap + 1]
    acc_ref[...] = acc

    # ---- pointwise 1x1 (+ folded BN/bias) + ReLU, per image ----
    def pointwise_one(r_in, r_out):
        a = acc_ref[pl.ds(r_in, Cin), :]                        # (Cin, L)
        y = pwa_ref[:, 0:1] * a[0:1, :] + bias_ref[...]         # (Cout, L)
        for ci in range(1, Cin):
            y = y + pwa_ref[:, ci:ci + 1] * a[ci:ci + 1, :]
        # Dropout is identity in eval mode.
        o_ref[pl.ds(r_out, Cout), :] = jnp.maximum(y, 0.0)

    if B_blk <= 8:
        # short trip count: fully static offsets, visible to the LLO scheduler
        for bb in range(B_blk):
            pointwise_one(bb * Cin, bb * Cout)
    else:
        # large blocks: bound live ranges with a real loop
        def body(bb, carry):
            pointwise_one(pl.multiple_of(bb * Cin, Cin),
                          pl.multiple_of(bb * Cout, Cout))
            return carry
        lax.fori_loop(0, B_blk, body, 0)


def _pick_batch_block(N, Cin, Cout, Lx, L, target_bytes=2 << 20):
    """Largest divisor of N whose per-step block stays near `target_bytes` while keeping
    the sublane extents (B_blk*Cin, B_blk*Cout) multiples of 8 (or the full array)."""
    per_img = 4 * (Cin * Lx + Cout * L)
    cap = max(1, target_bytes // per_img)
    cands = [d for d in range(1, N + 1)
             if N % d == 0 and (d == N or ((d * Cin) % 8 == 0 and (d * Cout) % 8 == 0))]
    fits = [d for d in cands if d <= cap]
    return max(fits) if fits else min(cands)


def unit_forward(x_nchw, params):
    """Runs the Unit forward pass. x_nchw: (N, Cin, H, W) float32. Returns NCHW."""
    dw_w, dw_b = params["dw_w"], params["dw_b"]
    pw_w, pw_b = params["pw_w"], params["pw_b"]
    gamma, beta = params["bn_gamma"], params["bn_beta"]
    rmean = params.get("bn_running_mean", jnp.zeros_like(gamma))
    rvar = params.get("bn_running_var", jnp.ones_like(gamma))
    eps = 1e-5

    N, Cin, H, W = x_nchw.shape
    Cout = pw_w.shape[0]

    # Padded row stride. Once W is large, align it to 128 so the ky*Wp tap component is
    # vreg-aligned and only the 3 kx lane shifts remain.
    Wp = W + 2 if W < 64 else _round_up(W + 2, 128)
    L = _round_up(H * Wp, 128)              # lane-dense compute/output length
    Lx_req = L + 2 * Wp + 2                 # every tap slice x[:, off:off+L] stays in-bounds
    Hrows = pl.cdiv(Lx_req, Wp)
    Lx = Hrows * Wp

    # ---- layout plumbing (wrapper side): ONE pad (halo + tail rows) + ONE reshape ----
    x_pad = jnp.pad(x_nchw, ((0, 0), (0, 0), (1, Hrows - H - 1), (1, Wp - W - 1)))
    x_flat = x_pad.reshape(N * Cin, Lx)     # (batch*channel) on sublanes, spatial on lanes

    # ---- one-time weight-side constant folding ----
    scale = gamma / jnp.sqrt(rvar + eps)                    # (Cout,)
    pw2 = pw_w.reshape(Cout, Cin)                           # (Cout, Cin)
    pwa = pw2 * scale[:, None]                              # BN scale folded into weights
    bias_f = beta + scale * (pw2 @ dw_b + pw_b - rmean)     # dw/pw bias + BN folded
    bias_col = bias_f[:, None]                              # (Cout, 1)

    B_blk = _pick_batch_block(N, Cin, Cout, Lx, L)
    dww_tiled = jnp.tile(dw_w.reshape(Cin, 9), (B_blk, 1))  # (B_blk*Cin, 9), tap = ky*3+kx

    # VMEM budget: double-buffered in/out blocks + scratch + headroom (well under v7x 64 MiB)
    block_bytes = 4 * B_blk * (2 * Cin * Lx + 2 * Cout * L + Cin * L)
    vmem_limit = int(min(32 * 2**20, max(16 * 2**20, block_bytes + (1 << 20))))

    kernel = functools.partial(_unit_kernel, B_blk=B_blk, Cin=Cin, Cout=Cout, L=L, Wp=Wp)

    out = pl.pallas_call(
        kernel,
        out_shape=jax.ShapeDtypeStruct((N * Cout, L), jnp.float32),
        grid_spec=pltpu.PrefetchScalarGridSpec(
            num_scalar_prefetch=0,
            grid=(N // B_blk,),
            in_specs=[
                pl.BlockSpec((B_blk * Cin, Lx), lambda b: (b, 0)),
                pl.BlockSpec((B_blk * Cin, 9), lambda b: (0, 0)),
                pl.BlockSpec((Cout, Cin), lambda b: (0, 0)),
                pl.BlockSpec((Cout, 1), lambda b: (0, 0)),
            ],
            out_specs=pl.BlockSpec((B_blk * Cout, L), lambda b: (b, 0)),
            scratch_shapes=[pltpu.VMEM((B_blk * Cin, L), jnp.float32)],
        ),
        compiler_params=pltpu.CompilerParams(
            dimension_semantics=("parallel",),
            vmem_limit_bytes=vmem_limit),
    )(x_flat, dww_tiled, pwa, bias_col)

    # un-flatten p = h*Wp + w -> (N, Cout, H, W); discard padded columns / tail rows.
    # (In a multi-Unit network this step would be skipped and the flat layout reused.)
    out = out.reshape(N, Cout, L)[:, :, :H * Wp].reshape(N, Cout, H, Wp)[:, :, :, :W]
    return out


def _reference_forward(x_nchw, params):
    """Pure-JAX reference (lax conv) for correctness checking."""
    dw_w, dw_b = params["dw_w"], params["dw_b"]
    pw_w, pw_b = params["pw_w"], params["pw_b"]
    gamma, beta = params["bn_gamma"], params["bn_beta"]
    rmean = params.get("bn_running_mean", jnp.zeros_like(gamma))
    rvar = params.get("bn_running_var", jnp.ones_like(gamma))
    eps = 1e-5
    Cin = x_nchw.shape[1]
    # depthwise: groups = Cin, weight (Cin, 1, 3, 3)
    y = lax.conv_general_dilated(
        x_nchw, dw_w, window_strides=(1, 1), padding=((1, 1), (1, 1)),
        dimension_numbers=("NCHW", "OIHW", "NCHW"), feature_group_count=Cin)
    y = y + dw_b[None, :, None, None]
    # pointwise 1x1
    y = lax.conv_general_dilated(
        y, pw_w, window_strides=(1, 1), padding=((0, 0), (0, 0)),
        dimension_numbers=("NCHW", "OIHW", "NCHW"))
    y = y + pw_b[None, :, None, None]
    # eval-mode BN with running stats
    y = (y - rmean[None, :, None, None]) / jnp.sqrt(rvar + eps)[None, :, None, None]
    y = y * gamma[None, :, None, None] + beta[None, :, None, None]
    return jnp.maximum(y, 0.0)


def make_params(key, in_channels, out_channels):
    ks = jax.random.split(key, 6)
    return {
        # depthwise conv: (Cin, 1, 3, 3), groups = Cin
        "dw_w": jax.random.normal(ks[0], (in_channels, 1, 3, 3), jnp.float32) * 0.2,
        "dw_b": jax.random.normal(ks[1], (in_channels,), jnp.float32) * 0.1,
        # pointwise conv: (Cout, Cin, 1, 1)
        "pw_w": jax.random.normal(ks[2], (out_channels, in_channels, 1, 1), jnp.float32) * 0.2,
        "pw_b": jax.random.normal(ks[3], (out_channels,), jnp.float32) * 0.1,
        # BatchNorm affine params + running stats (fresh init)
        "bn_gamma": 1.0 + 0.1 * jax.random.normal(ks[4], (out_channels,), jnp.float32),
        "bn_beta": 0.1 * jax.random.normal(ks[5], (out_channels,), jnp.float32),
        "bn_running_mean": jnp.zeros((out_channels,), jnp.float32),
        "bn_running_var": jnp.ones((out_channels,), jnp.float32),
    }


if __name__ == "__main__":
    key = jax.random.PRNGKey(0)
    k_x, k_p = jax.random.split(key)

    N, Cin, Cout, H, W = 2, 4, 8, 16, 16
    x = jax.random.normal(k_x, (N, Cin, H, W), jnp.float32)
    params = make_params(k_p, Cin, Cout)

    out = unit_forward(x, params)
    out = jax.block_until_ready(out)

    ref = jax.block_until_ready(_reference_forward(x, params))
    assert out.shape == (N, Cout, H, W), out.shape
    assert jnp.allclose(out, ref, atol=1e-4, rtol=1e-4), float(jnp.max(jnp.abs(out - ref)))

    print("KERNEL_OK")
</pallas_src>

<mosaic_0001>
module attributes {stable_mosaic.version = 11 : i64} {
  func.func @_unit_kernel(%arg0: i32, %arg1: memref<8x432xf32, #tpu.memory_space<vmem>>, %arg2: memref<8x9xf32, #tpu.memory_space<vmem>>, %arg3: memref<8x4xf32, #tpu.memory_space<vmem>>, %arg4: memref<8x1xf32, #tpu.memory_space<vmem>>, %arg5: memref<16x384xf32, #tpu.memory_space<vmem>>, %arg6: memref<8x384xf32, #tpu.memory_space<vmem>>) attributes {dimension_semantics = [#tpu.dimension_semantics<parallel>], iteration_bounds = array<i64: 1>, scalar_prefetch = 0 : i64, scratch_operands = 1 : i64, tpu.core_type = #tpu.core_type<tc>, window_params = [{transform_indices = @transform_0, window_bounds = array<i64: 8, 432>}, {pipeline_mode = #tpu.pipeline_mode<synchronous>, transform_indices = @transform_1, window_bounds = array<i64: 8, 9>}, {pipeline_mode = #tpu.pipeline_mode<synchronous>, transform_indices = @transform_2, window_bounds = array<i64: 8, 4>}, {pipeline_mode = #tpu.pipeline_mode<synchronous>, transform_indices = @transform_3, window_bounds = array<i64: 8, 1>}, {transform_indices = @transform_4, window_bounds = array<i64: 16, 384>}]} {
    %c0 = arith.constant 0 : index
    %c0_0 = arith.constant 0 : index
    %0 = vector.load %arg1[%c0, %c0_0] : memref<8x432xf32, #tpu.memory_space<vmem>>, vector<8x384xf32>
    %c0_1 = arith.constant 0 : index
    %c0_2 = arith.constant 0 : index
    %1 = vector.load %arg2[%c0_1, %c0_2] : memref<8x9xf32, #tpu.memory_space<vmem>>, vector<8x1xf32>
    %2 = vector.broadcast %1 : vector<8x1xf32> to vector<8x384xf32>
    %3 = arith.mulf %0, %2 : vector<8x384xf32>
    %c0_3 = arith.constant 0 : index
    %c1 = arith.constant 1 : index
    %4 = vector.load %arg1[%c0_3, %c1] : memref<8x432xf32, #tpu.memory_space<vmem>>, vector<8x384xf32>
    %c0_4 = arith.constant 0 : index
    %c1_5 = arith.constant 1 : index
    %5 = vector.load %arg2[%c0_4, %c1_5] : memref<8x9xf32, #tpu.memory_space<vmem>>, vector<8x1xf32>
    %6 = vector.broadcast %5 : vector<8x1xf32> to vector<8x384xf32>
    %7 = arith.mulf %4, %6 : vector<8x384xf32>
    %8 = arith.addf %3, %7 : vector<8x384xf32>
    %c0_6 = arith.constant 0 : index
    %c2 = arith.constant 2 : index
    %9 = vector.load %arg1[%c0_6, %c2] : memref<8x432xf32, #tpu.memory_space<vmem>>, vector<8x384xf32>
    %c0_7 = arith.constant 0 : index
    %c2_8 = arith.constant 2 : index
    %10 = vector.load %arg2[%c0_7, %c2_8] : memref<8x9xf32, #tpu.memory_space<vmem>>, vector<8x1xf32>
    %11 = vector.broadcast %10 : vector<8x1xf32> to vector<8x384xf32>
    %12 = arith.mulf %9, %11 : vector<8x384xf32>
    %13 = arith.addf %8, %12 : vector<8x384xf32>
    %c0_9 = arith.constant 0 : index
    %c18 = arith.constant 18 : index
    %14 = vector.load %arg1[%c0_9, %c18] : memref<8x432xf32, #tpu.memory_space<vmem>>, vector<8x384xf32>
    %c0_10 = arith.constant 0 : index
    %c3 = arith.constant 3 : index
    %15 = vector.load %arg2[%c0_10, %c3] : memref<8x9xf32, #tpu.memory_space<vmem>>, vector<8x1xf32>
    %16 = vector.broadcast %15 : vector<8x1xf32> to vector<8x384xf32>
    %17 = arith.mulf %14, %16 : vector<8x384xf32>
    %18 = arith.addf %13, %17 : vector<8x384xf32>
    %c0_11 = arith.constant 0 : index
    %c19 = arith.constant 19 : index
    %19 = vector.load %arg1[%c0_11, %c19] : memref<8x432xf32, #tpu.memory_space<vmem>>, vector<8x384xf32>
    %c0_12 = arith.constant 0 : index
    %c4 = arith.constant 4 : index
    %20 = vector.load %arg2[%c0_12, %c4] : memref<8x9xf32, #tpu.memory_space<vmem>>, vector<8x1xf32>
    %21 = vector.broadcast %20 : vector<8x1xf32> to vector<8x384xf32>
    %22 = arith.mulf %19, %21 : vector<8x384xf32>
    %23 = arith.addf %18, %22 : vector<8x384xf32>
    %c0_13 = arith.constant 0 : index
    %c20 = arith.constant 20 : index
    %24 = vector.load %arg1[%c0_13, %c20] : memref<8x432xf32, #tpu.memory_space<vmem>>, vector<8x384xf32>
    %c0_14 = arith.constant 0 : index
    %c5 = arith.constant 5 : index
    %25 = vector.load %arg2[%c0_14, %c5] : memref<8x9xf32, #tpu.memory_space<vmem>>, vector<8x1xf32>
    %26 = vector.broadcast %25 : vector<8x1xf32> to vector<8x384xf32>
    %27 = arith.mulf %24, %26 : vector<8x384xf32>
    %28 = arith.addf %23, %27 : vector<8x384xf32>
    %c0_15 = arith.constant 0 : index
    %c36 = arith.constant 36 : index
    %29 = vector.load %arg1[%c0_15, %c36] : memref<8x432xf32, #tpu.memory_space<vmem>>, vector<8x384xf32>
    %c0_16 = arith.constant 0 : index
    %c6 = arith.constant 6 : index
    %30 = vector.load %arg2[%c0_16, %c6] : memref<8x9xf32, #tpu.memory_space<vmem>>, vector<8x1xf32>
    %31 = vector.broadcast %30 : vector<8x1xf32> to vector<8x384xf32>
    %32 = arith.mulf %29, %31 : vector<8x384xf32>
    %33 = arith.addf %28, %32 : vector<8x384xf32>
    %c0_17 = arith.constant 0 : index
    %c37 = arith.constant 37 : index
    %34 = vector.load %arg1[%c0_17, %c37] : memref<8x432xf32, #tpu.memory_space<vmem>>, vector<8x384xf32>
    %c0_18 = arith.constant 0 : index
    %c7 = arith.constant 7 : index
    %35 = vector.load %arg2[%c0_18, %c7] : memref<8x9xf32, #tpu.memory_space<vmem>>, vector<8x1xf32>
    %36 = vector.broadcast %35 : vector<8x1xf32> to vector<8x384xf32>
    %37 = arith.mulf %34, %36 : vector<8x384xf32>
    %38 = arith.addf %33, %37 : vector<8x384xf32>
    %c0_19 = arith.constant 0 : index
    %c38 = arith.constant 38 : index
    %39 = vector.load %arg1[%c0_19, %c38] : memref<8x432xf32, #tpu.memory_space<vmem>>, vector<8x384xf32>
    %c0_20 = arith.constant 0 : index
    %c8 = arith.constant 8 : index
    %40 = vector.load %arg2[%c0_20, %c8] : memref<8x9xf32, #tpu.memory_space<vmem>>, vector<8x1xf32>
    %41 = vector.broadcast %40 : vector<8x1xf32> to vector<8x384xf32>
    %42 = arith.mulf %39, %41 : vector<8x384xf32>
    %43 = arith.addf %38, %42 : vector<8x384xf32>
    %c0_21 = arith.constant 0 : index
    %c0_22 = arith.constant 0 : index
    %44 = vector.load %arg6[%c0_21, %c0_22] : memref<8x384xf32, #tpu.memory_space<vmem>>, vector<8x384xf32>
    tpu.vector_store %arg6[%c0_21, %c0_22], %43 {strides = array<i32>} : memref<8x384xf32, #tpu.memory_space<vmem>>, vector<8x384xf32>,
    %c0_23 = arith.constant 0 : index
    %c0_24 = arith.constant 0 : index
    %45 = vector.load %arg6[%c0_23, %c0_24] : memref<8x384xf32, #tpu.memory_space<vmem>>, vector<4x384xf32>
    %c0_25 = arith.constant 0 : index
    %c0_26 = arith.constant 0 : index
    %46 = vector.load %arg3[%c0_25, %c0_26] : memref<8x4xf32, #tpu.memory_space<vmem>>, vector<8x1xf32>
    %47 = vector.extract_strided_slice %45 {offsets = [0, 0], sizes = [1, 384], strides = [1, 1]} : vector<4x384xf32> to vector<1x384xf32>
    %48 = vector.broadcast %46 : vector<8x1xf32> to vector<8x384xf32>
    %49 = vector.broadcast %47 : vector<1x384xf32> to vector<8x384xf32>
    %50 = arith.mulf %48, %49 : vector<8x384xf32>
    %c0_27 = arith.constant 0 : index
    %c0_28 = arith.constant 0 : index
    %51 = vector.load %arg4[%c0_27, %c0_28] : memref<8x1xf32, #tpu.memory_space<vmem>>, vector<8x1xf32>
    %52 = vector.broadcast %51 : vector<8x1xf32> to vector<8x384xf32>
    %53 = arith.addf %50, %52 : vector<8x384xf32>
    %c0_29 = arith.constant 0 : index
    %c1_30 = arith.constant 1 : index
    %54 = vector.load %arg3[%c0_29, %c1_30] : memref<8x4xf32, #tpu.memory_space<vmem>>, vector<8x1xf32>
    %55 = vector.extract_strided_slice %45 {offsets = [1, 0], sizes = [1, 384], strides = [1, 1]} : vector<4x384xf32> to vector<1x384xf32>
    %56 = vector.broadcast %54 : vector<8x1xf32> to vector<8x384xf32>
    %57 = vector.broadcast %55 : vector<1x384xf32> to vector<8x384xf32>
    %58 = arith.mulf %56, %57 : vector<8x384xf32>
    %59 = arith.addf %53, %58 : vector<8x384xf32>
    %c0_31 = arith.constant 0 : index
    %c2_32 = arith.constant 2 : index
    %60 = vector.load %arg3[%c0_31, %c2_32] : memref<8x4xf32, #tpu.memory_space<vmem>>, vector<8x1xf32>
    %61 = vector.extract_strided_slice %45 {offsets = [2, 0], sizes = [1, 384], strides = [1, 1]} : vector<4x384xf32> to vector<1x384xf32>
    %62 = vector.broadcast %60 : vector<8x1xf32> to vector<8x384xf32>
    %63 = vector.broadcast %61 : vector<1x384xf32> to vector<8x384xf32>
    %64 = arith.mulf %62, %63 : vector<8x384xf32>
    %65 = arith.addf %59, %64 : vector<8x384xf32>
    %c0_33 = arith.constant 0 : index
    %c3_34 = arith.constant 3 : index
    %66 = vector.load %arg3[%c0_33, %c3_34] : memref<8x4xf32, #tpu.memory_space<vmem>>, vector<8x1xf32>
    %67 = vector.extract_strided_slice %45 {offsets = [3, 0], sizes = [1, 384], strides = [1, 1]} : vector<4x384xf32> to vector<1x384xf32>
    %68 = vector.broadcast %66 : vector<8x1xf32> to vector<8x384xf32>
    %69 = vector.broadcast %67 : vector<1x384xf32> to vector<8x384xf32>
    %70 = arith.mulf %68, %69 : vector<8x384xf32>
    %71 = arith.addf %65, %70 : vector<8x384xf32>
    %cst = arith.constant 0.000000e+00 : f32
    %72 = vector.broadcast %cst : f32 to vector<8x384xf32>
    %73 = arith.maximumf %71, %72 : vector<8x384xf32>
    %c0_35 = arith.constant 0 : index
    %c0_36 = arith.constant 0 : index
    %74 = vector.load %arg5[%c0_35, %c0_36] : memref<16x384xf32, #tpu.memory_space<vmem>>, vector<8x384xf32>
    tpu.vector_store %arg5[%c0_35, %c0_36], %73 {strides = array<i32>} : memref<16x384xf32, #tpu.memory_space<vmem>>, vector<8x384xf32>,
    %c4_37 = arith.constant 4 : index
    %c0_38 = arith.constant 0 : index
    %75 = vector.load %arg6[%c4_37, %c0_38] : memref<8x384xf32, #tpu.memory_space<vmem>>, vector<4x384xf32>
    %c0_39 = arith.constant 0 : index
    %c0_40 = arith.constant 0 : index
    %76 = vector.load %arg3[%c0_39, %c0_40] : memref<8x4xf32, #tpu.memory_space<vmem>>, vector<8x1xf32>
    %77 = vector.extract_strided_slice %75 {offsets = [0, 0], sizes = [1, 384], strides = [1, 1]} : vector<4x384xf32> to vector<1x384xf32>
    %78 = vector.broadcast %76 : vector<8x1xf32> to vector<8x384xf32>
    %79 = vector.broadcast %77 : vector<1x384xf32> to vector<8x384xf32>
    %80 = arith.mulf %78, %79 : vector<8x384xf32>
    %c0_41 = arith.constant 0 : index
    %c0_42 = arith.constant 0 : index
    %81 = vector.load %arg4[%c0_41, %c0_42] : memref<8x1xf32, #tpu.memory_space<vmem>>, vector<8x1xf32>
    %82 = vector.broadcast %81 : vector<8x1xf32> to vector<8x384xf32>
    %83 = arith.addf %80, %82 : vector<8x384xf32>
    %c0_43 = arith.constant 0 : index
    %c1_44 = arith.constant 1 : index
    %84 = vector.load %arg3[%c0_43, %c1_44] : memref<8x4xf32, #tpu.memory_space<vmem>>, vector<8x1xf32>
    %85 = vector.extract_strided_slice %75 {offsets = [1, 0], sizes = [1, 384], strides = [1, 1]} : vector<4x384xf32> to vector<1x384xf32>
    %86 = vector.broadcast %84 : vector<8x1xf32> to vector<8x384xf32>
    %87 = vector.broadcast %85 : vector<1x384xf32> to vector<8x384xf32>
    %88 = arith.mulf %86, %87 : vector<8x384xf32>
    %89 = arith.addf %83, %88 : vector<8x384xf32>
    %c0_45 = arith.constant 0 : index
    %c2_46 = arith.constant 2 : index
    %90 = vector.load %arg3[%c0_45, %c2_46] : memref<8x4xf32, #tpu.memory_space<vmem>>, vector<8x1xf32>
    %91 = vector.extract_strided_slice %75 {offsets = [2, 0], sizes = [1, 384], strides = [1, 1]} : vector<4x384xf32> to vector<1x384xf32>
    %92 = vector.broadcast %90 : vector<8x1xf32> to vector<8x384xf32>
    %93 = vector.broadcast %91 : vector<1x384xf32> to vector<8x384xf32>
    %94 = arith.mulf %92, %93 : vector<8x384xf32>
    %95 = arith.addf %89, %94 : vector<8x384xf32>
    %c0_47 = arith.constant 0 : index
    %c3_48 = arith.constant 3 : index
    %96 = vector.load %arg3[%c0_47, %c3_48] : memref<8x4xf32, #tpu.memory_space<vmem>>, vector<8x1xf32>
    %97 = vector.extract_strided_slice %75 {offsets = [3, 0], sizes = [1, 384], strides = [1, 1]} : vector<4x384xf32> to vector<1x384xf32>
    %98 = vector.broadcast %96 : vector<8x1xf32> to vector<8x384xf32>
    %99 = vector.broadcast %97 : vector<1x384xf32> to vector<8x384xf32>
    %100 = arith.mulf %98, %99 : vector<8x384xf32>
    %101 = arith.addf %95, %100 : vector<8x384xf32>
    %cst_49 = arith.constant 0.000000e+00 : f32
    %102 = vector.broadcast %cst_49 : f32 to vector<8x384xf32>
    %103 = arith.maximumf %101, %102 : vector<8x384xf32>
    %c8_50 = arith.constant 8 : index
    %c0_51 = arith.constant 0 : index
    %104 = vector.load %arg5[%c8_50, %c0_51] : memref<16x384xf32, #tpu.memory_space<vmem>>, vector<8x384xf32>
    tpu.vector_store %arg5[%c8_50, %c0_51], %103 {strides = array<i32>} : memref<16x384xf32, #tpu.memory_space<vmem>>, vector<8x384xf32>,
    return
  }
  func.func @transform_0(%arg0: i32) -> (i32, i32) {
    %c0_i32 = arith.constant 0 : i32
    %c0_i32_0 = arith.constant 0 : i32
    return %arg0, %c0_i32 : i32, i32
  }
  func.func @transform_1(%arg0: i32) -> (i32, i32) {
    %c0_i32 = arith.constant 0 : i32
    %c0_i32_0 = arith.constant 0 : i32
    %c0_i32_1 = arith.constant 0 : i32
    return %c0_i32, %c0_i32_0 : i32, i32
  }
  func.func @transform_2(%arg0: i32) -> (i32, i32) {
    %c0_i32 = arith.constant 0 : i32
    %c0_i32_0 = arith.constant 0 : i32
    %c0_i32_1 = arith.constant 0 : i32
    return %c0_i32, %c0_i32_0 : i32, i32
  }
  func.func @transform_3(%arg0: i32) -> (i32, i32) {
    %c0_i32 = arith.constant 0 : i32
    %c0_i32_0 = arith.constant 0 : i32
    %c0_i32_1 = arith.constant 0 : i32
    return %c0_i32, %c0_i32_0 : i32, i32
  }
  func.func @transform_4(%arg0: i32) -> (i32, i32) {
    %c0_i32 = arith.constant 0 : i32
    %c0_i32_0 = arith.constant 0 : i32
    return %arg0, %c0_i32 : i32, i32
  }
}

</mosaic_0001>

<llo_original>
// kernel: tpu_custom_call.1
$region0: #{tpu_custom_call.1}
  #allocation0 [shape = 'u32[]', space=smem, size = 0x4, offset = 0x4, fixed_abs, tag = 'smem constant byte address 0x4 - core index']
  #allocation1 [shape = 'u32[144,128]{1,0:T(1,128)}', space=vmem, size = 0x12000, scoped, tag = 'internal scratch']
  #allocation2 [shape = 'f32[8,384]{1,0:T(8,128)}', space=vmem, size = 0x3000, scoped, tag = 'scratch operand']
  %s0 = inlined_call_operand.hbm [shape: f32[8,432], index: 0, kind: input, shape index: {}]
  %s1 = inlined_call_operand.vmem [shape: f32[8,9], index: 1, kind: input, shape index: {}]
  %s2 = inlined_call_operand.vmem [shape: f32[8,4], index: 2, kind: input, shape index: {}]
  %s3 = inlined_call_operand.vmem [shape: f32[8,1], index: 3, kind: input, shape index: {}]
  %s4 = inlined_call_operand.hbm [shape: f32[16,384], index: 4, kind: output, shape index: {}]
  %s5 = sld [smem:[#allocation0]]
  $region30: #{tpu_custom_call.1} parent=0
    _
  %s7 = ssub.s32 1, %s5
  %s8 = scalar_select 0, %s7, %s5
  $region1: #{tpu_custom_call.1} parent=0
    #allocation3 [shape = 'u8[16384]{0}', space=vmem, size = 0x4000, scoped, tag = 'input window, operand 0, single buffered']
    #allocation4 [shape = 's32[1]{0}', space=sflag, size = 0x4, scoped, tag = 'scoped memory for tpu_custom_call.1']
    #allocation5 [shape = 's32[1]{0}', space=sflag, size = 0x4, scoped, tag = 'scoped memory for tpu_custom_call.1']
    #allocation6 [shape = 'u8[24576]{0}', space=vmem, size = 0x6000, scoped, tag = 'output window, operand 0, single buffered']
    %9 = vsyncpa [#allocation4], 0
    %10 = vsyncpa [#allocation5], 0
    // Predicated region
    $region2: #{tpu_custom_call.1} parent=1 // pred_check
      _
    $region3: #{tpu_custom_call.1} parent=1 // pred_check_branch
      %12 = sbr.rel (0) target = $region5
    $region4: #{tpu_custom_call.1} parent=1 // pred_region
      %s14 = ssub.s32 512, 512
      %15 = vsyncadd [#allocation4], %s14
      %s17 = sshll.u32 [#allocation3], 4
      %s18 = int_to_ptr.vmem [resolvable:$true] %s17
      %20 = dma.hbm_to_vmem [thread:$0]  %s0, 512, %s18, [#allocation4]
    $region5: #{tpu_custom_call.1} parent=1 // pred_fallthru
      _
    // Predicated region
    $region6: #{tpu_custom_call.1} parent=1 // pred_check
      _
    $region7: #{tpu_custom_call.1} parent=1 // pred_check_branch
      %22 = sbr.rel (0) target = $region9
    $region8: #{tpu_custom_call.1} parent=1 // pred_region
      _
    $region9: #{tpu_custom_call.1} parent=1 // pred_fallthru
      _
    // Predicated region
    $region10: #{tpu_custom_call.1} parent=1 // pred_check
      _
    $region11: #{tpu_custom_call.1} parent=1 // pred_check_branch
      %24 = sbr.rel (0) target = $region13
    $region12: #{tpu_custom_call.1} parent=1 // pred_region
      _
    $region13: #{tpu_custom_call.1} parent=1 // pred_fallthru
      _
    // Predicated region
    $region14: #{tpu_custom_call.1} parent=1 // pred_check
      _
    $region15: #{tpu_custom_call.1} parent=1 // pred_check_branch
      %26 = sbr.rel (0) target = $region17
    $region16: #{tpu_custom_call.1} parent=1 // pred_region
      _
    $region17: #{tpu_custom_call.1} parent=1 // pred_fallthru
      _
    // Predicated region
    $region18: #{tpu_custom_call.1} parent=1 // pred_check
      _
    $region19: #{tpu_custom_call.1} parent=1 // pred_check_branch
      %28 = sbr.rel (0) target = $region21
    $region20: #{tpu_custom_call.1} parent=1 // pred_region
      %29 = dma.done [#allocation4], 512
    $region21: #{tpu_custom_call.1} parent=1 // pred_fallthru
      _
    %v30 = vld [vmem:[#allocation3] sm:$0xff]
    %v31 = vld [vmem:[#allocation3 + $0x8] sm:$0xff]
    %v32 = vld [vmem:[#allocation3 + $0x10] sm:$0xff]
    %v33 = vld [vmem:[%s1] sm:$0xff]
    %35 = vset.pattern.permute.xlu0 0
    %36 = vperm.xlu0 %35, %v33
    %v37 = vpop.permute.xlu0 %36
    %v39 = vmul.f32 %v30, %v37
    %v40 = vmul.f32 %v31, %v37
    %v41 = vmul.f32 %v32, %v37
    %v42 = vld [vmem:[#allocation3] sm:$0xff]
    %v43 = vld [vmem:[#allocation3 + $0x8] sm:$0xff]
    %v44 = vld [vmem:[#allocation3 + $0x10] sm:$0xff]
    %v45 = vld [vmem:[#allocation3 + $0x18] sm:$0xff]
    %46 = vset.pattern.permute.xlu0 1
    %47 = vperm.xlu0 %46, %v33
    %v48 = vpop.permute.xlu0 %47
    %v50 = vmul.f32 %v42, %v48
    %v51 = vmul.f32 %v43, %v48
    %v52 = vmul.f32 %v44, %v48
    %v53 = vmul.f32 %v45, %v48
    %58 = vrot.lane.b32.xlu0 %v50, 127
    %v59 = vpop.permute.xlu0 %58
    %60 = vrot.lane.b32.xlu0 %v51, 127
    %v61 = vpop.permute.xlu0 %60
    %62 = vrot.lane.b32.xlu0 %v52, 127
    %v63 = vpop.permute.xlu0 %62
    %64 = vrot.lane.b32.xlu0 %v53, 127
    %v65 = vpop.permute.xlu0 %64
    %vm66 = vcmask 1039360
    %v67 = vsel %vm66, %v59, %v61
    %v68 = vsel %vm66, %v61, %v63
    %v69 = vsel %vm66, %v63, %v65
    %v73 = vadd.f32 %v39, %v67
    %v74 = vadd.f32 %v40, %v68
    %v75 = vadd.f32 %v41, %v69
    %76 = vset.pattern.permute.xlu0 2
    %77 = vperm.xlu0 %76, %v33
    %v78 = vpop.permute.xlu0 %77
    %v80 = vmul.f32 %v42, %v78
    %v81 = vmul.f32 %v43, %v78
    %v82 = vmul.f32 %v44, %v78
    %v83 = vmul.f32 %v45, %v78
    %88 = vrot.lane.b32.xlu0 %v80, 126
    %v89 = vpop.permute.xlu0 %88
    %90 = vrot.lane.b32.xlu0 %v81, 126
    %v91 = vpop.permute.xlu0 %90
    %92 = vrot.lane.b32.xlu0 %v82, 126
    %v93 = vpop.permute.xlu0 %92
    %94 = vrot.lane.b32.xlu0 %v83, 126
    %v95 = vpop.permute.xlu0 %94
    %vm96 = vcmask 1031168
    %v97 = vsel %vm96, %v89, %v91
    %v98 = vsel %vm96, %v91, %v93
    %v99 = vsel %vm96, %v93, %v95
    %v103 = vadd.f32 %v73, %v97
    %v104 = vadd.f32 %v74, %v98
    %v105 = vadd.f32 %v75, %v99
    %106 = vset.pattern.permute.xlu0 3
    %107 = vperm.xlu0 %106, %v33
    %v108 = vpop.permute.xlu0 %107
    %v110 = vmul.f32 %v42, %v108
    %v111 = vmul.f32 %v43, %v108
    %v112 = vmul.f32 %v44, %v108
    %v113 = vmul.f32 %v45, %v108
    %118 = vrot.lane.b32.xlu0 %v110, 110
    %v119 = vpop.permute.xlu0 %118
    %120 = vrot.lane.b32.xlu0 %v111, 110
    %v121 = vpop.permute.xlu0 %120
    %122 = vrot.lane.b32.xlu0 %v112, 110
    %v123 = vpop.permute.xlu0 %122
    %124 = vrot.lane.b32.xlu0 %v113, 110
    %v125 = vpop.permute.xlu0 %124
    %vm126 = vcmask 900096
    %v127 = vsel %vm126, %v119, %v121
    %v128 = vsel %vm126, %v121, %v123
    %v129 = vsel %vm126, %v123, %v125
    %v133 = vadd.f32 %v103, %v127
    %v134 = vadd.f32 %v104, %v128
    %v135 = vadd.f32 %v105, %v129
    %136 = vset.pattern.permute.xlu0 4
    %137 = vperm.xlu0 %136, %v33
    %v138 = vpop.permute.xlu0 %137
    %v140 = vmul.f32 %v42, %v138
    %v141 = vmul.f32 %v43, %v138
    %v142 = vmul.f32 %v44, %v138
    %v143 = vmul.f32 %v45, %v138
    %148 = vrot.lane.b32.xlu0 %v140, 109
    %v149 = vpop.permute.xlu0 %148
    %150 = vrot.lane.b32.xlu0 %v141, 109
    %v151 = vpop.permute.xlu0 %150
    %152 = vrot.lane.b32.xlu0 %v142, 109
    %v153 = vpop.permute.xlu0 %152
    %154 = vrot.lane.b32.xlu0 %v143, 109
    %v155 = vpop.permute.xlu0 %154
    %vm156 = vcmask 891904
    %v157 = vsel %vm156, %v149, %v151
    %v158 = vsel %vm156, %v151, %v153
    %v159 = vsel %vm156, %v153, %v155
    %v163 = vadd.f32 %v133, %v157
    %v164 = vadd.f32 %v134, %v158
    %v165 = vadd.f32 %v135, %v159
    %166 = vset.pattern.permute.xlu0 5
    %167 = vperm.xlu0 %166, %v33
    %v168 = vpop.permute.xlu0 %167
    %v170 = vmul.f32 %v42, %v168
    %v171 = vmul.f32 %v43, %v168
    %v172 = vmul.f32 %v44, %v168
    %v173 = vmul.f32 %v45, %v168
    %178 = vrot.lane.b32.xlu0 %v170, 108
    %v179 = vpop.permute.xlu0 %178
    %180 = vrot.lane.b32.xlu0 %v171, 108
    %v181 = vpop.permute.xlu0 %180
    %182 = vrot.lane.b32.xlu0 %v172, 108
    %v183 = vpop.permute.xlu0 %182
    %184 = vrot.lane.b32.xlu0 %v173, 108
    %v185 = vpop.permute.xlu0 %184
    %vm186 = vcmask 883712
    %v187 = vsel %vm186, %v179, %v181
    %v188 = vsel %vm186, %v181, %v183
    %v189 = vsel %vm186, %v183, %v185
    %v193 = vadd.f32 %v163, %v187
    %v194 = vadd.f32 %v164, %v188
    %v195 = vadd.f32 %v165, %v189
    %196 = vset.pattern.permute.xlu0 6
    %197 = vperm.xlu0 %196, %v33
    %v198 = vpop.permute.xlu0 %197
    %v200 = vmul.f32 %v42, %v198
    %v201 = vmul.f32 %v43, %v198
    %v202 = vmul.f32 %v44, %v198
    %v203 = vmul.f32 %v45, %v198
    %208 = vrot.lane.b32.xlu0 %v200, 92
    %v209 = vpop.permute.xlu0 %208
    %210 = vrot.lane.b32.xlu0 %v201, 92
    %v211 = vpop.permute.xlu0 %210
    %212 = vrot.lane.b32.xlu0 %v202, 92
    %v213 = vpop.permute.xlu0 %212
    %214 = vrot.lane.b32.xlu0 %v203, 92
    %v215 = vpop.permute.xlu0 %214
    %vm216 = vcmask 752640
    %v217 = vsel %vm216, %v209, %v211
    %v218 = vsel %vm216, %v211, %v213
    %v219 = vsel %vm216, %v213, %v215
    %v223 = vadd.f32 %v193, %v217
    %v224 = vadd.f32 %v194, %v218
    %v225 = vadd.f32 %v195, %v219
    %226 = vset.pattern.permute.xlu0 7
    %227 = vperm.xlu0 %226, %v33
    %v228 = vpop.permute.xlu0 %227
    %v230 = vmul.f32 %v42, %v228
    %v231 = vmul.f32 %v43, %v228
    %v232 = vmul.f32 %v44, %v228
    %v233 = vmul.f32 %v45, %v228
    %238 = vrot.lane.b32.xlu0 %v230, 91
    %v239 = vpop.permute.xlu0 %238
    %240 = vrot.lane.b32.xlu0 %v231, 91
    %v241 = vpop.permute.xlu0 %240
    %242 = vrot.lane.b32.xlu0 %v232, 91
    %v243 = vpop.permute.xlu0 %242
    %244 = vrot.lane.b32.xlu0 %v233, 91
    %v245 = vpop.permute.xlu0 %244
    %vm246 = vcmask 744448
    %v247 = vsel %vm246, %v239, %v241
    %v248 = vsel %vm246, %v241, %v243
    %v249 = vsel %vm246, %v243, %v245
    %v253 = vadd.f32 %v223, %v247
    %v254 = vadd.f32 %v224, %v248
    %v255 = vadd.f32 %v225, %v249
    %256 = vset.pattern.permute.xlu0 8
    %257 = vperm.xlu0 %256, %v33
    %v258 = vpop.permute.xlu0 %257
    %v260 = vmul.f32 %v42, %v258
    %v261 = vmul.f32 %v43, %v258
    %v262 = vmul.f32 %v44, %v258
    %v263 = vmul.f32 %v45, %v258
    %268 = vrot.lane.b32.xlu0 %v260, 90
    %v269 = vpop.permute.xlu0 %268
    %270 = vrot.lane.b32.xlu0 %v261, 90
    %v271 = vpop.permute.xlu0 %270
    %272 = vrot.lane.b32.xlu0 %v262, 90
    %v273 = vpop.permute.xlu0 %272
    %274 = vrot.lane.b32.xlu0 %v263, 90
    %v275 = vpop.permute.xlu0 %274
    %vm276 = vcmask 736256
    %v277 = vsel %vm276, %v269, %v271
    %v278 = vsel %vm276, %v271, %v273
    %v279 = vsel %vm276, %v273, %v275
    %v283 = vadd.f32 %v253, %v277
    %v284 = vadd.f32 %v254, %v278
    %v285 = vadd.f32 %v255, %v279
    %286 = vst [vmem:[#allocation2] sm:$0xff] %v283
    %287 = vst [vmem:[#allocation2 + $0x8] sm:$0xff] %v284
    %288 = vst [vmem:[#allocation2 + $0x10] sm:$0xff] %v285
    %v289 = vld [vmem:[#allocation2] sm:$0xf]
    %v290 = vld [vmem:[#allocation2 + $0x8] sm:$0xf]
    %v291 = vld [vmem:[#allocation2 + $0x10] sm:$0xf]
    %v292 = vld [vmem:[%s2] sm:$0xff]
    %294 = vset.pattern.permute.xlu0 0
    %295 = vperm.xlu0 %294, %v292
    %v296 = vpop.permute.xlu0 %295
    %v298 = vlaneseq
    %v299 = vshrl.u32 %v298, 7
    %v300 = vsub.s32 0, %v299
    %v301 = vrot.slane %v289, %v300
    %v302 = vlaneseq
    %v303 = vshrl.u32 %v302, 7
    %v304 = vsub.s32 0, %v303
    %v305 = vrot.slane %v290, %v304
    %v306 = vlaneseq
    %v307 = vshrl.u32 %v306, 7
    %v308 = vsub.s32 0, %v307
    %v309 = vrot.slane %v291, %v308
    %v310 = vmul.f32 %v296, %v301
    %v311 = vmul.f32 %v296, %v305
    %v312 = vmul.f32 %v296, %v309
    %v313 = vld [vmem:[%s3] sm:$0xff]
    %315 = vset.pattern.permute.xlu0 0
    %316 = vperm.xlu0 %315, %v313
    %v317 = vpop.permute.xlu0 %316
    %v319 = vadd.f32 %v310, %v317
    %v320 = vadd.f32 %v311, %v317
    %v321 = vadd.f32 %v312, %v317
    %322 = vset.pattern.permute.xlu0 1
    %323 = vperm.xlu0 %322, %v292
    %v324 = vpop.permute.xlu0 %323
    %v326 = vlaneseq
    %v327 = vshrl.u32 %v326, 7
    %v328 = vsub.s32 1, %v327
    %v329 = vrot.slane %v289, %v328
    %v330 = vlaneseq
    %v331 = vshrl.u32 %v330, 7
    %v332 = vsub.s32 1, %v331
    %v333 = vrot.slane %v290, %v332
    %v334 = vlaneseq
    %v335 = vshrl.u32 %v334, 7
    %v336 = vsub.s32 1, %v335
    %v337 = vrot.slane %v291, %v336
    %v338 = vmul.f32 %v324, %v329
    %v339 = vmul.f32 %v324, %v333
    %v340 = vmul.f32 %v324, %v337
    %v341 = vadd.f32 %v319, %v338
    %v342 = vadd.f32 %v320, %v339
    %v343 = vadd.f32 %v321, %v340
    %344 = vset.pattern.permute.xlu0 2
    %345 = vperm.xlu0 %344, %v292
    %v346 = vpop.permute.xlu0 %345
    %v348 = vlaneseq
    %v349 = vshrl.u32 %v348, 7
    %v350 = vsub.s32 2, %v349
    %v351 = vrot.slane %v289, %v350
    %v352 = vlaneseq
    %v353 = vshrl.u32 %v352, 7
    %v354 = vsub.s32 2, %v353
    %v355 = vrot.slane %v290, %v354
    %v356 = vlaneseq
    %v357 = vshrl.u32 %v356, 7
    %v358 = vsub.s32 2, %v357
    %v359 = vrot.slane %v291, %v358
    %v360 = vmul.f32 %v346, %v351
    %v361 = vmul.f32 %v346, %v355
    %v362 = vmul.f32 %v346, %v359
    %v363 = vadd.f32 %v341, %v360
    %v364 = vadd.f32 %v342, %v361
    %v365 = vadd.f32 %v343, %v362
    %366 = vset.pattern.permute.xlu0 3
    %367 = vperm.xlu0 %366, %v292
    %v368 = vpop.permute.xlu0 %367
    %v370 = vlaneseq
    %v371 = vshrl.u32 %v370, 7
    %v372 = vsub.s32 3, %v371
    %v373 = vrot.slane %v289, %v372
    %v374 = vlaneseq
    %v375 = vshrl.u32 %v374, 7
    %v376 = vsub.s32 3, %v375
    %v377 = vrot.slane %v290, %v376
    %v378 = vlaneseq
    %v379 = vshrl.u32 %v378, 7
    %v380 = vsub.s32 3, %v379
    %v381 = vrot.slane %v291, %v380
    %v382 = vmul.f32 %v368, %v373
    %v383 = vmul.f32 %v368, %v377
    %v384 = vmul.f32 %v368, %v381
    %v385 = vadd.f32 %v363, %v382
    %v386 = vadd.f32 %v364, %v383
    %v387 = vadd.f32 %v365, %v384
    %v388 = vmax.f32 %v385, 0.0
    %v389 = vmax.f32 %v386, 0.0
    %v390 = vmax.f32 %v387, 0.0
    %391 = vst [vmem:[#allocation6] sm:$0xff] %v388
    %392 = vst [vmem:[#allocation6 + $0x8] sm:$0xff] %v389
    %393 = vst [vmem:[#allocation6 + $0x10] sm:$0xff] %v390
    %v394 = vld [vmem:[#allocation2] sm:$0xf0]
    %v395 = vld [vmem:[#allocation2 + $0x8] sm:$0xf0]
    %v396 = vld [vmem:[#allocation2 + $0x10] sm:$0xf0]
    %v397 = vld [vmem:[%s2] sm:$0xff]
    %399 = vset.pattern.permute.xlu0 0
    %400 = vperm.xlu0 %399, %v397
    %v401 = vpop.permute.xlu0 %400
    %v403 = vlaneseq
    %v404 = vshrl.u32 %v403, 7
    %v405 = vsub.s32 4, %v404
    %v406 = vrot.slane %v394, %v405
    %v407 = vlaneseq
    %v408 = vshrl.u32 %v407, 7
    %v409 = vsub.s32 4, %v408
    %v410 = vrot.slane %v395, %v409
    %v411 = vlaneseq
    %v412 = vshrl.u32 %v411, 7
    %v413 = vsub.s32 4, %v412
    %v414 = vrot.slane %v396, %v413
    %v415 = vmul.f32 %v401, %v406
    %v416 = vmul.f32 %v401, %v410
    %v417 = vmul.f32 %v401, %v414
    %v418 = vld [vmem:[%s3] sm:$0xff]
    %420 = vset.pattern.permute.xlu0 0
    %421 = vperm.xlu0 %420, %v418
    %v422 = vpop.permute.xlu0 %421
    %v424 = vadd.f32 %v415, %v422
    %v425 = vadd.f32 %v416, %v422
    %v426 = vadd.f32 %v417, %v422
    %427 = vset.pattern.permute.xlu0 1
    %428 = vperm.xlu0 %427, %v397
    %v429 = vpop.permute.xlu0 %428
    %v431 = vlaneseq
    %v432 = vshrl.u32 %v431, 7
    %v433 = vsub.s32 5, %v432
    %v434 = vrot.slane %v394, %v433
    %v435 = vlaneseq
    %v436 = vshrl.u32 %v435, 7
    %v437 = vsub.s32 5, %v436
    %v438 = vrot.slane %v395, %v437
    %v439 = vlaneseq
    %v440 = vshrl.u32 %v439, 7
    %v441 = vsub.s32 5, %v440
    %v442 = vrot.slane %v396, %v441
    %v443 = vmul.f32 %v429, %v434
    %v444 = vmul.f32 %v429, %v438
    %v445 = vmul.f32 %v429, %v442
    %v446 = vadd.f32 %v424, %v443
    %v447 = vadd.f32 %v425, %v444
    %v448 = vadd.f32 %v426, %v445
    %449 = vset.pattern.permute.xlu0 2
    %450 = vperm.xlu0 %449, %v397
    %v451 = vpop.permute.xlu0 %450
    %v453 = vlaneseq
    %v454 = vshrl.u32 %v453, 7
    %v455 = vsub.s32 6, %v454
    %v456 = vrot.slane %v394, %v455
    %v457 = vlaneseq
    %v458 = vshrl.u32 %v457, 7
    %v459 = vsub.s32 6, %v458
    %v460 = vrot.slane %v395, %v459
    %v461 = vlaneseq
    %v462 = vshrl.u32 %v461, 7
    %v463 = vsub.s32 6, %v462
    %v464 = vrot.slane %v396, %v463
    %v465 = vmul.f32 %v451, %v456
    %v466 = vmul.f32 %v451, %v460
    %v467 = vmul.f32 %v451, %v464
    %v468 = vadd.f32 %v446, %v465
    %v469 = vadd.f32 %v447, %v466
    %v470 = vadd.f32 %v448, %v467
    %471 = vset.pattern.permute.xlu0 3
    %472 = vperm.xlu0 %471, %v397
    %v473 = vpop.permute.xlu0 %472
    %v475 = vlaneseq
    %v476 = vshrl.u32 %v475, 7
    %v477 = vsub.s32 7, %v476
    %v478 = vrot.slane %v394, %v477
    %v479 = vlaneseq
    %v480 = vshrl.u32 %v479, 7
    %v481 = vsub.s32 7, %v480
    %v482 = vrot.slane %v395, %v481
    %v483 = vlaneseq
    %v484 = vshrl.u32 %v483, 7
    %v485 = vsub.s32 7, %v484
    %v486 = vrot.slane %v396, %v485
    %v487 = vmul.f32 %v473, %v478
    %v488 = vmul.f32 %v473, %v482
    %v489 = vmul.f32 %v473, %v486
    %v490 = vadd.f32 %v468, %v487
    %v491 = vadd.f32 %v469, %v488
    %v492 = vadd.f32 %v470, %v489
    %v493 = vmax.f32 %v490, 0.0
    %v494 = vmax.f32 %v491, 0.0
    %v495 = vmax.f32 %v492, 0.0
    %496 = vst [vmem:[#allocation6 + $0x18] sm:$0xff] %v493
    %497 = vst [vmem:[#allocation6 + $0x20] sm:$0xff] %v494
    %498 = vst [vmem:[#allocation6 + $0x28] sm:$0xff] %v495
    // Predicated region
    $region22: #{tpu_custom_call.1} parent=1 // pred_check
      _
    $region23: #{tpu_custom_call.1} parent=1 // pred_check_branch
      %500 = sbr.rel (0) target = $region25
    $region24: #{tpu_custom_call.1} parent=1 // pred_region
      %s502 = ssub.s32 768, 768
      %503 = vsyncadd [#allocation5], %s502
      %s504 = sshll.u32 [#allocation6], 4
      %s505 = int_to_ptr.vmem [resolvable:$true] %s504
      %510 = dma.vmem_to_hbm [thread:$0]  %s505, 768, %s4, [#allocation5], 384, 384, 24
    $region25: #{tpu_custom_call.1} parent=1 // pred_fallthru
      _
    // Predicated region
    $region26: #{tpu_custom_call.1} parent=1 // pred_check
      _
    $region27: #{tpu_custom_call.1} parent=1 // pred_check_branch
      %512 = sbr.rel (0) target = $region29
    $region28: #{tpu_custom_call.1} parent=1 // pred_region
      %513 = dma.done [#allocation5], 768
    $region29: #{tpu_custom_call.1} parent=1 // pred_fallthru
      _
    %514 = vsyncpa [#allocation4], 1
    %515 = vsyncpa [#allocation5], 1

</llo_original>
